<compile_context>
chip_gen: v6e
topology: v6e:2x2x1
jax: 0.10.0
libtpu: 0.0.40
codegen_flags: <defaults>
</compile_context>

<pallas_src>
import math
import jax
import jax.numpy as jnp
from jax.experimental import pallas as pl
from jax.experimental.pallas import tpu as pltpu


def _round_up(n: int, m: int) -> int:
    return ((n + m - 1) // m) * m


def _cdiv(a: int, b: int) -> int:
    return -(-a // b)


def _sublane_granule(*dtypes) -> int:
    """Sublane multiple required by the narrowest streamed dtype (8/16/32)."""
    g = 8
    for dt in dtypes:
        g = max(g, 8 * (4 // max(1, jnp.dtype(dt).itemsize)))
    return g


def lora_expert_kernel(x_ref, w1_ref, b1_ref, w2_ref, b2_ref, o_ref):
    # In-kernel cast of the activations to the (bf16) weight dtype.
    x = x_ref[...].astype(w1_ref.dtype)
    # fc1: MXU matmul with fp32 accumulation, fp32 bias add, ReLU in fp32.
    h = jnp.dot(x, w1_ref[...], preferred_element_type=jnp.float32)
    h = jnp.maximum(h + b1_ref[...], 0.0)
    # fc2: cast activation back to bf16 for the MXU, fp32 accumulate + bias.
    y = jnp.dot(h.astype(w2_ref.dtype), w2_ref[...],
                preferred_element_type=jnp.float32)
    o_ref[...] = (y + b2_ref[...]).astype(o_ref.dtype)


def prepare_lora_expert_params(w1_t, b1, w2_t, b2, *, compute_dtype=jnp.bfloat16):
    """Pad (lane-dense, multiples of 128) and cast the parameters ONCE.

    w1_t: (input_dim, rank)    b1: (rank,)
    w2_t: (rank, output_dim)   b2: (output_dim,)
    """
    input_dim, rank = w1_t.shape
    rank2, output_dim = w2_t.shape
    assert rank2 == rank
    r_pad = _round_up(rank, 128)
    out_pad = _round_up(output_dim, 128)
    w1p = jnp.pad(w1_t.astype(compute_dtype), ((0, 0), (0, r_pad - rank)))
    b1p = jnp.pad(b1.astype(jnp.float32), (0, r_pad - rank)).reshape(1, r_pad)
    w2p = jnp.pad(w2_t.astype(compute_dtype),
                  ((0, r_pad - rank), (0, out_pad - output_dim)))
    b2p = jnp.pad(b2.astype(jnp.float32),
                  (0, out_pad - output_dim)).reshape(1, out_pad)
    return dict(w1=w1p, b1=b1p, w2=w2p, b2=b2p,
                input_dim=input_dim, rank=rank, output_dim=output_dim)


def _vmem_budget_bytes() -> int:
    """~75% of physical VMEM (96 MiB on v5e/v6e, 48 MiB on v7x)."""
    try:
        phys = int(pltpu.get_tpu_info().vmem_capacity_bytes)
    except Exception:
        phys = 64 * 1024 * 1024  # assume the smallest generation (v7x)
    return phys * 3 // 4


def _vmem_need_bytes(tile_b, tile_n, input_dim, r_pad, x_bytes, w_bytes, o_bytes):
    need = 2 * tile_b * input_dim * x_bytes      # x tile (double-buffered)
    need += 2 * tile_b * tile_n * o_bytes        # out tile (double-buffered)
    need += 2 * input_dim * r_pad * w_bytes      # W1 (2 bufs, constant index map)
    need += 2 * r_pad * tile_n * w_bytes         # W2
    need += 2 * (r_pad + tile_n) * 4             # biases (fp32)
    need += tile_b * (r_pad + tile_n) * 4        # fp32 intermediates h / y
    return need


def lora_expert(x, params, *, tile_b=512, max_tile_n=2048, out_dtype=None):
    """Fused forward: relu(x @ w1 + b1) @ w2 + b2 using pre-prepared params."""
    B, input_dim = x.shape
    assert input_dim == params["input_dim"]
    w1p, b1p, w2p, b2p = params["w1"], params["b1"], params["w2"], params["b2"]
    output_dim = params["output_dim"]
    r_pad = w1p.shape[1]
    out_pad = w2p.shape[1]
    if out_dtype is None:
        out_dtype = w1p.dtype  # narrow (bf16) output stream by default

    # ---- Tile selection --------------------------------------------------
    min_sub = _sublane_granule(x.dtype, out_dtype)
    # Batch tile: multiple of the sublane granule, capped by the batch size.
    tile_b = _round_up(max(min_sub, min(tile_b, _round_up(B, min_sub))), min_sub)
    # Guarantee >= 2 grid steps on the "parallel" batch axis when possible
    # (feeds both v7x TensorCores).
    if _cdiv(B, tile_b) < 2:
        tb2 = _round_up(_cdiv(B, 2), min_sub)
        if tb2 < tile_b:
            tile_b = tb2
    # Output tile: largest multiple of 128 <= max_tile_n that divides out_pad.
    tile_n = max(128, min(out_pad, (max_tile_n // 128) * 128))
    while out_pad % tile_n != 0:
        tile_n -= 128

    # ---- VMEM budget (generation-aware, ~25% headroom) --------------------
    budget = _vmem_budget_bytes()
    x_bytes = jnp.dtype(x.dtype).itemsize
    w_bytes = jnp.dtype(w1p.dtype).itemsize
    o_bytes = jnp.dtype(out_dtype).itemsize

    def need(tb, tn):
        return _vmem_need_bytes(tb, tn, input_dim, r_pad, x_bytes, w_bytes, o_bytes)

    while need(tile_b, tile_n) > budget and tile_b > min_sub:
        tile_b = max(min_sub, _round_up(tile_b // 2, min_sub))
    while need(tile_b, tile_n) > budget and tile_n > 128:
        tile_n = max(128, (tile_n // 2 // 128) * 128)
        while out_pad % tile_n != 0:
            tile_n -= 128

    grid = (_cdiv(B, tile_b), out_pad // tile_n)

    out = pl.pallas_call(
        lora_expert_kernel,
        out_shape=jax.ShapeDtypeStruct((B, out_pad), out_dtype),
        grid_spec=pltpu.PrefetchScalarGridSpec(
            num_scalar_prefetch=0,
            grid=grid,
            in_specs=[
                # x tile: constant across the inner (j) axis -> fetched once per i.
                pl.BlockSpec((tile_b, input_dim), lambda i, j: (i, 0)),
                # W1 / b1: fully resident (constant index map).
                pl.BlockSpec((input_dim, r_pad), lambda i, j: (0, 0)),
                pl.BlockSpec((1, r_pad), lambda i, j: (0, 0)),
                # W2 / b2: tiled along the (padded) output dim only.
                pl.BlockSpec((r_pad, tile_n), lambda i, j: (0, j)),
                pl.BlockSpec((1, tile_n), lambda i, j: (0, j)),
            ],
            out_specs=pl.BlockSpec((tile_b, tile_n), lambda i, j: (i, j)),
        ),
        compiler_params=pltpu.CompilerParams(
            dimension_semantics=("parallel", "parallel"),
            vmem_limit_bytes=budget,
        ),
    )(x, w1p, b1p, w2p, b2p)

    # Strip lane padding only when it was actually added (skip identity slice).
    if out_pad != output_dim:
        out = out[:, :output_dim]
    return out


def init_linear_params(key, in_features, out_features):
    """Deterministic init mirroring PyTorch nn.Linear defaults; weight is
    returned already transposed to (in, out)."""
    k_w, k_b = jax.random.split(key)
    bound = 1.0 / math.sqrt(in_features)
    w = jax.random.uniform(k_w, (in_features, out_features),
                           minval=-bound, maxval=bound, dtype=jnp.float32)
    b = jax.random.uniform(k_b, (out_features,),
                           minval=-bound, maxval=bound, dtype=jnp.float32)
    return w, b


if __name__ == "__main__":
    # Small shapes consistent with the module: batch=32, input_dim=32,
    # rank=8 (module default), output_dim=32.
    B, input_dim, rank, output_dim = 32, 32, 8, 32

    key = jax.random.PRNGKey(0)
    k_x, k_fc1, k_fc2 = jax.random.split(key, 3)

    x = jax.random.normal(k_x, (B, input_dim), dtype=jnp.float32)
    w1_t, b1 = init_linear_params(k_fc1, input_dim, rank)   # fc1
    w2_t, b2 = init_linear_params(k_fc2, rank, output_dim)  # fc2

    # Pad/cast parameters once (hoisted out of the per-call path).
    params = prepare_lora_expert_params(w1_t, b1, w2_t, b2)

    out = lora_expert(x, params)
    out = jax.block_until_ready(out)

    # Pure-JAX reference with the same bf16 mixed-precision casts as the kernel.
    xb = x.astype(jnp.bfloat16).astype(jnp.float32)
    w1b = w1_t.astype(jnp.bfloat16).astype(jnp.float32)
    w2b = w2_t.astype(jnp.bfloat16).astype(jnp.float32)
    h_ref = jnp.maximum(xb @ w1b + b1, 0.0)
    ref = h_ref.astype(jnp.bfloat16).astype(jnp.float32) @ w2b + b2
    ref = ref.astype(jnp.bfloat16).astype(jnp.float32)   # kernel emits bf16

    assert out.shape == (B, output_dim)
    assert jnp.allclose(out.astype(jnp.float32), ref, atol=2e-2, rtol=2e-2), \
        "mismatch vs reference"

    print("KERNEL_OK")
</pallas_src>

<mosaic_0001>
module attributes {stable_mosaic.version = 11 : i64} {
  func.func @lora_expert_kernel(%arg0: i32, %arg1: i32, %arg2: memref<16x32xf32, #tpu.memory_space<vmem>>, %arg3: memref<32x128xbf16, #tpu.memory_space<vmem>>, %arg4: memref<1x128xf32, #tpu.memory_space<vmem>>, %arg5: memref<128x128xbf16, #tpu.memory_space<vmem>>, %arg6: memref<1x128xf32, #tpu.memory_space<vmem>>, %arg7: memref<16x128xbf16, #tpu.memory_space<vmem>>) attributes {dimension_semantics = [#tpu.dimension_semantics<parallel>, #tpu.dimension_semantics<parallel>], iteration_bounds = array<i64: 2, 1>, scalar_prefetch = 0 : i64, scratch_operands = 0 : i64, tpu.core_type = #tpu.core_type<tc>, window_params = [{transform_indices = @transform_0, window_bounds = array<i64: 16, 32>}, {pipeline_mode = #tpu.pipeline_mode<synchronous>, transform_indices = @transform_1, window_bounds = array<i64: 32, 128>}, {pipeline_mode = #tpu.pipeline_mode<synchronous>, transform_indices = @transform_2, window_bounds = array<i64: 1, 128>}, {transform_indices = @transform_3, window_bounds = array<i64: 128, 128>}, {transform_indices = @transform_4, window_bounds = array<i64: 1, 128>}, {transform_indices = @transform_5, window_bounds = array<i64: 16, 128>}]} {
    %c0 = arith.constant 0 : index
    %c0_0 = arith.constant 0 : index
    %0 = vector.load %arg2[%c0, %c0_0] : memref<16x32xf32, #tpu.memory_space<vmem>>, vector<16x32xf32>
    %1 = arith.truncf %0 : vector<16x32xf32> to vector<16x32xbf16>
    %c0_1 = arith.constant 0 : index
    %c0_2 = arith.constant 0 : index
    %2 = vector.load %arg3[%c0_1, %c0_2] : memref<32x128xbf16, #tpu.memory_space<vmem>>, vector<32x128xbf16>
    %cst = arith.constant dense<0.000000e+00> : vector<16x128xf32>
    %3 = tpu.matmul %1, %2, %cst {dimension_numbers = #tpu.dot_dimension_numbers<[1], [0], [0], [1], [0, 0, 1, 1], [], []>} : vector<16x32xbf16>, vector<32x128xbf16>, vector<16x128xf32> -> vector<16x128xf32>
    %c0_3 = arith.constant 0 : index
    %c0_4 = arith.constant 0 : index
    %4 = vector.load %arg4[%c0_3, %c0_4] : memref<1x128xf32, #tpu.memory_space<vmem>>, vector<1x128xf32>
    %5 = vector.broadcast %4 : vector<1x128xf32> to vector<16x128xf32>
    %6 = arith.addf %3, %5 : vector<16x128xf32>
    %cst_5 = arith.constant 0.000000e+00 : f32
    %7 = vector.broadcast %cst_5 : f32 to vector<16x128xf32>
    %8 = arith.maximumf %6, %7 : vector<16x128xf32>
    %9 = arith.truncf %8 : vector<16x128xf32> to vector<16x128xbf16>
    %c0_6 = arith.constant 0 : index
    %c0_7 = arith.constant 0 : index
    %10 = vector.load %arg5[%c0_6, %c0_7] : memref<128x128xbf16, #tpu.memory_space<vmem>>, vector<128x128xbf16>
    %cst_8 = arith.constant dense<0.000000e+00> : vector<16x128xf32>
    %11 = tpu.matmul %9, %10, %cst_8 {dimension_numbers = #tpu.dot_dimension_numbers<[1], [0], [0], [1], [0, 0, 1, 1], [], []>} : vector<16x128xbf16>, vector<128x128xbf16>, vector<16x128xf32> -> vector<16x128xf32>
    %c0_9 = arith.constant 0 : index
    %c0_10 = arith.constant 0 : index
    %12 = vector.load %arg6[%c0_9, %c0_10] : memref<1x128xf32, #tpu.memory_space<vmem>>, vector<1x128xf32>
    %13 = vector.broadcast %12 : vector<1x128xf32> to vector<16x128xf32>
    %14 = arith.addf %11, %13 : vector<16x128xf32>
    %15 = arith.truncf %14 : vector<16x128xf32> to vector<16x128xbf16>
    %c0_11 = arith.constant 0 : index
    %c0_12 = arith.constant 0 : index
    %16 = vector.load %arg7[%c0_11, %c0_12] : memref<16x128xbf16, #tpu.memory_space<vmem>>, vector<16x128xbf16>
    tpu.vector_store %arg7[%c0_11, %c0_12], %15 {strides = array<i32>} : memref<16x128xbf16, #tpu.memory_space<vmem>>, vector<16x128xbf16>,
    return
  }
  func.func @transform_0(%arg0: i32, %arg1: i32) -> (i32, i32) {
    %c0_i32 = arith.constant 0 : i32
    %c0_i32_0 = arith.constant 0 : i32
    return %arg0, %c0_i32 : i32, i32
  }
  func.func @transform_1(%arg0: i32, %arg1: i32) -> (i32, i32) {
    %c0_i32 = arith.constant 0 : i32
    %c0_i32_0 = arith.constant 0 : i32
    %c0_i32_1 = arith.constant 0 : i32
    return %c0_i32, %c0_i32_0 : i32, i32
  }
  func.func @transform_2(%arg0: i32, %arg1: i32) -> (i32, i32) {
    %c0_i32 = arith.constant 0 : i32
    %c0_i32_0 = arith.constant 0 : i32
    %c0_i32_1 = arith.constant 0 : i32
    return %c0_i32, %c0_i32_0 : i32, i32
  }
  func.func @transform_3(%arg0: i32, %arg1: i32) -> (i32, i32) {
    %c0_i32 = arith.constant 0 : i32
    %c0_i32_0 = arith.constant 0 : i32
    return %c0_i32, %arg1 : i32, i32
  }
  func.func @transform_4(%arg0: i32, %arg1: i32) -> (i32, i32) {
    %c0_i32 = arith.constant 0 : i32
    %c0_i32_0 = arith.constant 0 : i32
    return %c0_i32, %arg1 : i32, i32
  }
  func.func @transform_5(%arg0: i32, %arg1: i32) -> (i32, i32) {
    %c0_i32 = arith.constant 0 : i32
    return %arg0, %arg1 : i32, i32
  }
}

</mosaic_0001>

<llo_original>
// kernel: tpu_custom_call.1
$region0: #{tpu_custom_call.1}
  #allocation0 [shape = 'u32[]', space=smem, size = 0x4, offset = 0x4, fixed_abs, tag = 'smem constant byte address 0x4 - core index']
  #allocation1 [shape = 'u32[144,128]{1,0:T(1,128)}', space=vmem, size = 0x12000, scoped, tag = 'internal scratch']
  %s0 = inlined_call_operand.hbm [shape: f32[32,32], index: 0, kind: input, shape index: {}]
  %s1 = inlined_call_operand.hbm [shape: bf16[32,128], index: 1, kind: input, shape index: {}]
  %s2 = inlined_call_operand.vmem [shape: f32[1,128], index: 2, kind: input, shape index: {}]
  %s3 = inlined_call_operand.hbm [shape: bf16[128,128], index: 3, kind: input, shape index: {}]
  %s4 = inlined_call_operand.vmem [shape: f32[1,128], index: 4, kind: input, shape index: {}]
  %s5 = inlined_call_operand.hbm [shape: bf16[32,128], index: 5, kind: output, shape index: {}]
  %s6 = sld [smem:[#allocation0]]
  $region65: #{tpu_custom_call.1} parent=0
    _
  %s8 = ssub.s32 1, %s6
  %s9 = scalar_select 0, %s8, %s6
  $region1: #{tpu_custom_call.1} parent=0
    #allocation2 [shape = 'u8[16384]{0}', space=vmem, size = 0x4000, scoped, tag = 'input window, operand 0']
    #allocation3 [shape = 's32[2]{0}', space=sflag, size = 0x8, scoped, tag = 'scoped memory for tpu_custom_call.1']
    #allocation4 [shape = 's32[2]{0}', space=sflag, size = 0x8, scoped, tag = 'scoped memory for tpu_custom_call.1']
    #allocation5 [shape = 'u8[8192]{0}', space=vmem, size = 0x2000, scoped, tag = 'input window, operand 1, single buffered']
    #allocation6 [shape = 's32[1]{0}', space=sflag, size = 0x4, scoped, tag = 'scoped memory for tpu_custom_call.1']
    #allocation7 [shape = 'u8[32768]{0}', space=vmem, size = 0x8000, scoped, tag = 'input window, operand 3, single buffered']
    #allocation8 [shape = 'u8[8192]{0}', space=vmem, size = 0x2000, scoped, tag = 'output window, operand 0']
    %10 = vsyncpa [#allocation3], 0
    %s11 = scalar_lea.sflag [#allocation3], 1
    %12 = vsyncpa %s11, 0
    %13 = vsyncpa [#allocation6], 0
    %14 = vsyncpa [#allocation4], 0
    %s15 = scalar_lea.sflag [#allocation4], 1
    %16 = vsyncpa %s15, 0
    loop: start=0, step=1, limit=4
    $region2: #{tpu_custom_call.1} parent=1 // loop_pre_header
      _
    $region3: #{tpu_custom_call.1} parent=1 // loop_header
      %s18 = sphi 0, %s22
      %p19 = scmp.ge.s32.totalorder %s18, 4
      %s25 = sphi 0, %s37
      %s26 = sphi 0, %s33
      %s27 = sphi 0, %s25
      %s28 = sphi 0, %s26
      %s29 = sphi 0, %s27
      %s30 = sphi 0, %s28
      %s40 = sphi 0, %s42
      %s43 = sphi 0, %s40
      %s44 = sphi 0, %s43
      %s60 = sphi 0, %s44
      %s64 = sphi 0, %s64
      %s66 = sphi 0, %s64
      %s67 = sphi 0, %s66
      %s81 = sphi 0, %s67
      %s85 = sphi 0, %s85
      %s87 = sphi 0, %s85
      %s88 = sphi 0, %s87
      %s102 = sphi 0, %s88
      %s108 = sphi 0, %s110
      %s111 = sphi 0, %s108
      %s112 = sphi 0, %s111
      %s128 = sphi 0, %s112
      %s134 = sphi 0, %s136
      %s137 = sphi 0, %s134
      %s138 = sphi 0, %s137
      %s154 = sphi 0, %s138
      %s162 = sphi 0, %s164
      %s165 = sphi 0, %s162
      %s166 = sphi 0, %s165
      %s182 = sphi 0, %s166
    $region4: #{tpu_custom_call.1} parent=1 // loop_header_branch
      %21 = sbr.rel (%p19) target = $region8
    $region5: #{tpu_custom_call.1} parent=1 // loop_body
      %s23 = ssub.s32 %s18, 1
      %s24 = ssub.s32 %s18, 2
      %s31 = sadd.s32 1, %s26
      %p32 = scmp.ge.s32.totalorder %s31, 1
      %s33 = scalar_select %p32, 0, %s31
      %s34 = sadd.s32 1, %s25
      %s35 = scalar_select %p32, %s34, %s25
      %p36 = scmp.ge.s32.totalorder %s35, 2
      %s37 = scalar_select %p36, 0, %s35
      %s38 = ssub.s32 %s25, %s37
      %p39 = scmp.eq.s32.totalorder %s38, 0
      %s41 = sadd.s32 %s40, 1
      %s42 = scalar_select %p39, %s40, %s41
      %p45 = pneg %p39
      %p46 = scmp.eq.s32.totalorder %s18, 1
      %p47 = por %p45, %p46
      %p48 = scmp.ne.s32.totalorder %s40, %s43
      %p49 = scmp.eq.s32.totalorder %s18, 0
      %p50 = por %p48, %p49
      %p51 = scmp.ne.s32.totalorder %s40, %s43
      %p52 = scmp.eq.s32.totalorder %s23, 1
      %p53 = por %p51, %p52
      %p54 = scmp.ne.s32.totalorder %s43, %s44
      %p55 = scmp.eq.s32.totalorder %s23, 0
      %p56 = por %p54, %p55
      %p57 = scmp.ne.s32.totalorder %s43, %s44
      %p58 = scmp.eq.s32.totalorder %s24, 1
      %p59 = por %p57, %p58
      %p61 = scmp.ne.s32.totalorder %s44, %s60
      %p62 = scmp.eq.s32.totalorder %s24, 0
      %p63 = por %p61, %p62
      %s65 = sadd.s32 %s64, 1
      %p68 = scmp.eq.s32.totalorder %s18, 1
      %p69 = scmp.ne.s32.totalorder %s64, %s66
      %p70 = scmp.eq.s32.totalorder %s18, 0
      %p71 = por %p69, %p70
      %p72 = scmp.ne.s32.totalorder %s64, %s66
      %p73 = scmp.eq.s32.totalorder %s23, 1
      %p74 = por %p72, %p73
      %p75 = scmp.ne.s32.totalorder %s66, %s67
      %p76 = scmp.eq.s32.totalorder %s23, 0
      %p77 = por %p75, %p76
      %p78 = scmp.ne.s32.totalorder %s66, %s67
      %p79 = scmp.eq.s32.totalorder %s24, 1
      %p80 = por %p78, %p79
      %p82 = scmp.ne.s32.totalorder %s67, %s81
      %p83 = scmp.eq.s32.totalorder %s24, 0
      %p84 = por %p82, %p83
      %s86 = sadd.s32 %s85, 1
      %p89 = scmp.eq.s32.totalorder %s18, 1
      %p90 = scmp.ne.s32.totalorder %s85, %s87
      %p91 = scmp.eq.s32.totalorder %s18, 0
      %p92 = por %p90, %p91
      %p93 = scmp.ne.s32.totalorder %s85, %s87
      %p94 = scmp.eq.s32.totalorder %s23, 1
      %p95 = por %p93, %p94
      %p96 = scmp.ne.s32.totalorder %s87, %s88
      %p97 = scmp.eq.s32.totalorder %s23, 0
      %p98 = por %p96, %p97
      %p99 = scmp.ne.s32.totalorder %s87, %s88
      %p100 = scmp.eq.s32.totalorder %s24, 1
      %p101 = por %p99, %p100
      %p103 = scmp.ne.s32.totalorder %s88, %s102
      %p104 = scmp.eq.s32.totalorder %s24, 0
      %p105 = por %p103, %p104
      %s106 = ssub.s32 %s26, %s33
      %p107 = scmp.eq.s32.totalorder %s106, 0
      %s109 = sadd.s32 %s108, 1
      %s110 = scalar_select %p107, %s108, %s109
      %p113 = pneg %p107
      %p114 = scmp.eq.s32.totalorder %s18, 1
      %p115 = por %p113, %p114
      %p116 = scmp.ne.s32.totalorder %s108, %s111
      %p117 = scmp.eq.s32.totalorder %s18, 0
      %p118 = por %p116, %p117
      %p119 = scmp.ne.s32.totalorder %s108, %s111
      %p120 = scmp.eq.s32.totalorder %s23, 1
      %p121 = por %p119, %p120
      %p122 = scmp.ne.s32.totalorder %s111, %s112
      %p123 = scmp.eq.s32.totalorder %s23, 0
      %p124 = por %p122, %p123
      %p125 = scmp.ne.s32.totalorder %s111, %s112
      %p126 = scmp.eq.s32.totalorder %s24, 1
      %p127 = por %p125, %p126
      %p129 = scmp.ne.s32.totalorder %s112, %s128
      %p130 = scmp.eq.s32.totalorder %s24, 0
      %p131 = por %p129, %p130
      %s132 = ssub.s32 %s26, %s33
      %p133 = scmp.eq.s32.totalorder %s132, 0
      %s135 = sadd.s32 %s134, 1
      %s136 = scalar_select %p133, %s134, %s135
      %p139 = pneg %p133
      %p140 = scmp.eq.s32.totalorder %s18, 1
      %p141 = por %p139, %p140
      %p142 = scmp.ne.s32.totalorder %s134, %s137
      %p143 = scmp.eq.s32.totalorder %s18, 0
      %p144 = por %p142, %p143
      %p145 = scmp.ne.s32.totalorder %s134, %s137
      %p146 = scmp.eq.s32.totalorder %s23, 1
      %p147 = por %p145, %p146
      %p148 = scmp.ne.s32.totalorder %s137, %s138
      %p149 = scmp.eq.s32.totalorder %s23, 0
      %p150 = por %p148, %p149
      %p151 = scmp.ne.s32.totalorder %s137, %s138
      %p152 = scmp.eq.s32.totalorder %s24, 1
      %p153 = por %p151, %p152
      %p155 = scmp.ne.s32.totalorder %s138, %s154
      %p156 = scmp.eq.s32.totalorder %s24, 0
      %p157 = por %p155, %p156
      %s158 = ssub.s32 %s25, %s37
      %s159 = ssub.s32 %s26, %s33
      %s160 = sor.u32 %s158, %s159
      %p161 = scmp.eq.s32.totalorder %s160, 0
      %s163 = sadd.s32 %s162, 1
      %s164 = scalar_select %p161, %s162, %s163
      %p167 = pneg %p161
      %p168 = scmp.eq.s32.totalorder %s18, 1
      %p169 = por %p167, %p168
      %p170 = scmp.ne.s32.totalorder %s162, %s165
      %p171 = scmp.eq.s32.totalorder %s18, 0
      %p172 = por %p170, %p171
      %p173 = scmp.ne.s32.totalorder %s162, %s165
      %p174 = scmp.eq.s32.totalorder %s23, 1
      %p175 = por %p173, %p174
      %p176 = scmp.ne.s32.totalorder %s165, %s166
      %p177 = scmp.eq.s32.totalorder %s23, 0
      %p178 = por %p176, %p177
      %p179 = scmp.ne.s32.totalorder %s165, %s166
      %p180 = scmp.eq.s32.totalorder %s24, 1
      %p181 = por %p179, %p180
      %p183 = scmp.ne.s32.totalorder %s166, %s182
      %p184 = scmp.eq.s32.totalorder %s24, 0
      %p185 = por %p183, %p184
      %p186 = scmp.le.s32.totalorder 1, %s18
      %p187 = scmp.lt.s32.totalorder %s18, 3
      %p188 = pnand %p186, %p187
      %p189 = pneg %p188
      // Predicated region
      $region9: #{tpu_custom_call.1} parent=5 // pred_check
        _
      $region10: #{tpu_custom_call.1} parent=5 // pred_check_branch
        %191 = sbr.rel (%p188) target = $region12
      $region11: #{tpu_custom_call.1} parent=5 // pred_region
        %s192 = ssub.s32 %s18, 1
        // Predicated region
        $region13: #{tpu_custom_call.1} parent=11 // pred_check
          %p193 = pneg %p77
        $region14: #{tpu_custom_call.1} parent=11 // pred_check_branch
          %195 = sbr.rel (%p193) target = $region16
        $region15: #{tpu_custom_call.1} parent=11 // pred_region
          %s197 = ssub.s32 256, 256
          %198 = vsyncadd [#allocation6], %s197
          %s199 = sshll.u32 [#allocation5], 4
          %s200 = int_to_ptr.vmem [resolvable:$true] %s199
          %205 = dma.hbm_to_vmem [thread:$0]  %s1, 256, %s200, [#allocation6], 64, 64, 4
        $region16: #{tpu_custom_call.1} parent=11 // pred_fallthru
          _
        // Predicated region
        $region17: #{tpu_custom_call.1} parent=11 // pred_check
          %p206 = pneg %p98
        $region18: #{tpu_custom_call.1} parent=11 // pred_check_branch
          %208 = sbr.rel (%p206) target = $region20
        $region19: #{tpu_custom_call.1} parent=11 // pred_region
          _
        $region20: #{tpu_custom_call.1} parent=11 // pred_fallthru
          _
        // Predicated region
        $region21: #{tpu_custom_call.1} parent=11 // pred_check
          %p209 = pneg %p124
        $region22: #{tpu_custom_call.1} parent=11 // pred_check_branch
          %211 = sbr.rel (%p209) target = $region24
        $region23: #{tpu_custom_call.1} parent=11 // pred_region
          %s213 = ssub.s32 1024, 1024
          %214 = vsyncadd [#allocation6], %s213
          %s215 = smul.addr %s28, 64
          %s216 = scalar_lea.hbm %s3, %s215
          %s217 = sshll.u32 [#allocation7], 4
          %s218 = int_to_ptr.vmem [resolvable:$true] %s217
          %223 = dma.hbm_to_vmem [thread:$0]  %s216, 1024, %s218, [#allocation6], 64, 64, 4
        $region24: #{tpu_custom_call.1} parent=11 // pred_fallthru
          _
        // Predicated region
        $region25: #{tpu_custom_call.1} parent=11 // pred_check
          %p224 = pneg %p150
        $region26: #{tpu_custom_call.1} parent=11 // pred_check_branch
          %226 = sbr.rel (%p224) target = $region28
        $region27: #{tpu_custom_call.1} parent=11 // pred_region
          %p227 = scmp.lt.s32.totalorder %s28, 0
          %s228 = scalar_select %p227, %s28, 0
          %s229 = scalar_lea.vmem %s4, %s228
        $region28: #{tpu_custom_call.1} parent=11 // pred_fallthru
          _
      $region12: #{tpu_custom_call.1} parent=5 // pred_fallthru
        _
      %p230 = scmp.lt.s32.totalorder %s18, 2
      // Predicated region
      $region29: #{tpu_custom_call.1} parent=5 // pred_check
        %p231 = pneg %p230
      $region30: #{tpu_custom_call.1} parent=5 // pred_check_branch
        %233 = sbr.rel (%p231) target = $region32
      $region31: #{tpu_custom_call.1} parent=5 // pred_region
        // Predicated region
        $region33: #{tpu_custom_call.1} parent=31 // pred_check
          %p234 = pneg %p50
        $region34: #{tpu_custom_call.1} parent=31 // pred_check_branch
          %236 = sbr.rel (%p234) target = $region36
        $region35: #{tpu_custom_call.1} parent=31 // pred_region
          %s237 = sand.u32 %s40, 1
          %s238 = scalar_lea.sflag [#allocation3], %s237
          %s239 = sand.u32 %s40, 1
          %s240 = smul.addr %s239, 16
          %s241 = scalar_lea.vmem [#allocation2], %s240
          %s242 = smul.u32 2, %s25
          %s244 = ssub.s32 256, 256
          %245 = vsyncadd %s238, %s244
          %s246 = smul.addr %s242, 128
          %s247 = scalar_lea.hbm %s0, %s246
          %s248 = sshll.u32 %s241, 4
          %s249 = int_to_ptr.vmem [resolvable:$true] %s248
          %254 = dma.hbm_to_vmem [thread:$0]  %s247, 256, %s249, %s238, 128, 128, 8
        $region36: #{tpu_custom_call.1} parent=31 // pred_fallthru
          _
      $region32: #{tpu_custom_call.1} parent=5 // pred_fallthru
        _
      %p255 = scmp.le.s32.totalorder 1, %s18
      %p256 = scmp.lt.s32.totalorder %s18, 3
      %p257 = pnand %p255, %p256
      %p258 = pneg %p257
      // Predicated region
      $region37: #{tpu_custom_call.1} parent=5 // pred_check
        _
      $region38: #{tpu_custom_call.1} parent=5 // pred_check_branch
        %260 = sbr.rel (%p257) target = $region40
      $region39: #{tpu_custom_call.1} parent=5 // pred_region
        %s261 = ssub.s32 %s18, 1
        %s262 = sand.u32 %s43, 1
        %s263 = scalar_lea.sflag [#allocation3], %s262
        %s264 = sand.u32 %s43, 1
        %s265 = smul.addr %s264, 16
        %s266 = scalar_lea.vmem [#allocation2], %s265
        // Predicated region
        $region41: #{tpu_custom_call.1} parent=39 // pred_check
          %p267 = pneg %p56
        $region42: #{tpu_custom_call.1} parent=39 // pred_check_branch
          %269 = sbr.rel (%p267) target = $region44
        $region43: #{tpu_custom_call.1} parent=39 // pred_region
          %270 = dma.done %s263, 256
        $region44: #{tpu_custom_call.1} parent=39 // pred_fallthru
          _
        // Predicated region
        $region45: #{tpu_custom_call.1} parent=39 // pred_check
          %p271 = pneg %p77
        $region46: #{tpu_custom_call.1} parent=39 // pred_check_branch
          %273 = sbr.rel (%p271) target = $region48
        $region47: #{tpu_custom_call.1} parent=39 // pred_region
          %274 = dma.done [#allocation6], 256
        $region48: #{tpu_custom_call.1} parent=39 // pred_fallthru
          _
        // Predicated region
        $region49: #{tpu_custom_call.1} parent=39 // pred_check
          %p275 = pneg %p124
        $region50: #{tpu_custom_call.1} parent=39 // pred_check_branch
          %277 = sbr.rel (%p275) target = $region52
        $region51: #{tpu_custom_call.1} parent=39 // pred_region
          %278 = dma.done [#allocation6], 1024
        $region52: #{tpu_custom_call.1} parent=39 // pred_fallthru
          _
        %s279 = sand.u32 %s43, 1
        %s280 = scalar_lea.sflag [#allocation3], %s279
        %s281 = sand.u32 %s43, 1
        %s282 = smul.addr %s281, 16
        %s283 = scalar_lea.vmem [#allocation2], %s282
        %p284 = pneg %p56
        %p285 = pneg %p53
        %p286 = pneg %p77
        %p287 = pneg %p74
        %p288 = pneg %p98
        %p289 = pneg %p95
        %p290 = pneg %p124
        %p291 = pneg %p121
        %p292 = scmp.lt.s32.totalorder %s28, 0
        %s293 = scalar_select %p292, %s28, 0
        %s294 = scalar_lea.vmem %s4, %s293
        %p295 = pneg %p150
        %p296 = pneg %p147
        %p297 = pneg %p178
        %p298 = pneg %p175
        %s299 = sand.u32 %s165, 1
        %s300 = scalar_lea.sflag [#allocation4], %s299
        %s301 = sand.u32 %s165, 1
        %s302 = smul.addr %s301, 8
        %s303 = scalar_lea.vmem [#allocation8], %s302
        %s304 = smul.u32 2, %s27
        %p305 = scmp.lt.s32.totalorder %s28, 0
        %s306 = scalar_select %p305, %s28, 0
        %s307 = scalar_lea.vmem %s4, %s306
        %s308 = smul.u32 2, %s27
        %v310 = vld [vmem:[%s266] sm:$0xff]
        %v311 = vld [vmem:[%s266 + $0x8] sm:$0xff]
        %v312 = vpack.c.bf16 %v311, %v310
        %v313 = vld [vmem:[#allocation5] sm:$0xf]
        %v314 = vld [vmem:[#allocation5 + $0x4] sm:$0xf]
        %v315 = vld [vmem:[#allocation5 + $0x8] sm:$0xf]
        %v316 = vld [vmem:[#allocation5 + $0xc] sm:$0xf]
        %v317 = vld [vmem:[%s2] sm:$0x1]
        %v319 = vlaneseq
        %v320 = vshrl.u32 %v319, 7
        %v321 = vsub.s32 0, %v320
        %v322 = vrot.slane %v317, %v321
        %v328 = vunpack.c.l.b16 %v313
        %v329 = vunpack.c.l.b16 %v314
        %v330 = vunpack.c.l.b16 %v315
        %v331 = vunpack.c.l.b16 %v316
        %v332 = vpack.c.b16 %v329, %v328
        %v333 = vpack.c.b16 %v331, %v330
        %vm336 = vcmask 261120
        %v338 = vsel %vm336, %v312, 0
        %340 = vmatprep.subr.bf16.mxu0 0
        %341 = vmatpush1.bf16.msra.mxu0 0
        %342 = vmatprep.subr.bf16.mxu0 0
        %343 = vmatpush1.bf16.msra.mxu0 0
        %344 = vmatprep.subr.bf16.mxu0 0
        %345 = vmatpush1.bf16.msra.mxu0 0
        %346 = vmatprep.subr.bf16.mxu0 0
        %347 = vmatpush1.bf16.msra.mxu0 0
        %348 = vmatprep.subr.bf16.mxu0 0
        %349 = vmatpush1.bf16.msra.mxu0 0
        %350 = vmatprep.subr.bf16.mxu0 0
        %351 = vmatpush1.bf16.msra.mxu0 0
        %352 = vmatprep.subr.bf16.mxu0 0
        %353 = vmatpush1.bf16.msra.mxu0 %v333
        %354 = vmatprep.subr.bf16.mxu0 0
        %355 = vmatpush1.bf16.msra.mxu0 %v332
        %356 = vmatprep.subr.bf16.mxu0 0
        %357 = vmatpush2.bf16.msra.mxu0 0
        %358 = vmatprep.subr.bf16.mxu0 0
        %359 = vmatpush2.bf16.msra.mxu0 0
        %360 = vmatprep.subr.bf16.mxu0 0
        %361 = vmatpush2.bf16.msra.mxu0 0
        %362 = vmatprep.subr.bf16.mxu0 0
        %363 = vmatpush2.bf16.msra.mxu0 0
        %364 = vmatprep.subr.bf16.mxu0 0
        %365 = vmatpush2.bf16.msra.mxu0 0
        %366 = vmatprep.subr.bf16.mxu0 0
        %367 = vmatpush2.bf16.msra.mxu0 0
        %368 = vmatprep.subr.bf16.mxu0 0
        %369 = vmatpush2.bf16.msra.mxu0 0
        %370 = vmatprep.subr.bf16.mxu0 0
        %371 = vmatpush2.bf16.msra.mxu0 0
        %372 = vmatprep.mubr.bf16.mxu0 0
        %373 = vmatmul.mubr.bf16.gmra.mxu0 %v338
        %v374 = vpop.f32.mrf.mxu0
        %v375 = vadd.f32 %v322, %v374
        %v376 = vpop.f32.mrf.mxu0
        %v377 = vpop.f32.mrf.mxu0
        %v378 = vadd.f32 %v322, %v377
        %v379 = vpop.f32.mrf.mxu0
        %380 = vdwg.mxu0
        %v381 = vmax.f32 %v375, 0.0
        %v382 = vmax.f32 %v378, 0.0
        %v383 = vpack.c.bf16 %v382, %v381
        %v384 = vld [vmem:[#allocation7] sm:$0xf]
        %v385 = vld [vmem:[#allocation7 + $0x4] sm:$0xf]
        %v386 = vld [vmem:[#allocation7 + $0x8] sm:$0xf]
        %v387 = vld [vmem:[#allocation7 + $0xc] sm:$0xf]
        %v388 = vld [vmem:[#allocation7 + $0x10] sm:$0xf]
        %v389 = vld [vmem:[#allocation7 + $0x14] sm:$0xf]
        %v390 = vld [vmem:[#allocation7 + $0x18] sm:$0xf]
        %v391 = vld [vmem:[#allocation7 + $0x1c] sm:$0xf]
        %v392 = vld [vmem:[#allocation7 + $0x20] sm:$0xf]
        %v393 = vld [vmem:[#allocation7 + $0x24] sm:$0xf]
        %v394 = vld [vmem:[#allocation7 + $0x28] sm:$0xf]
        %v395 = vld [vmem:[#allocation7 + $0x2c] sm:$0xf]
        %v396 = vld [vmem:[#allocation7 + $0x30] sm:$0xf]
        %v397 = vld [vmem:[#allocation7 + $0x34] sm:$0xf]
        %v398 = vld [vmem:[#allocation7 + $0x38] sm:$0xf]
        %v399 = vld [vmem:[#allocation7 + $0x3c] sm:$0xf]
        %v400 = vld [vmem:[%s307] sm:$0x1]
        %v402 = vlaneseq
        %v403 = vshrl.u32 %v402, 7
        %v404 = vsub.s32 0, %v403
        %v405 = vrot.slane %v400, %v404
        %v423 = vunpack.c.l.b16 %v384
        %v424 = vunpack.c.l.b16 %v385
        %v425 = vunpack.c.l.b16 %v386
        %v426 = vunpack.c.l.b16 %v387
        %v427 = vunpack.c.l.b16 %v388
        %v428 = vunpack.c.l.b16 %v389
        %v429 = vunpack.c.l.b16 %v390
        %v430 = vunpack.c.l.b16 %v391
        %v431 = vunpack.c.l.b16 %v392
        %v432 = vunpack.c.l.b16 %v393
        %v433 = vunpack.c.l.b16 %v394
        %v434 = vunpack.c.l.b16 %v395
        %v435 = vunpack.c.l.b16 %v396
        %v436 = vunpack.c.l.b16 %v397
        %v437 = vunpack.c.l.b16 %v398
        %v438 = vunpack.c.l.b16 %v399
        %v439 = vpack.c.b16 %v424, %v423
        %v440 = vpack.c.b16 %v426, %v425
        %v441 = vpack.c.b16 %v428, %v427
        %v442 = vpack.c.b16 %v430, %v429
        %v443 = vpack.c.b16 %v432, %v431
        %v444 = vpack.c.b16 %v434, %v433
        %v445 = vpack.c.b16 %v436, %v435
        %v446 = vpack.c.b16 %v438, %v437
        %455 = vmatprep.subr.bf16.mxu0 0
        %456 = vmatpush1.bf16.msra.mxu0 %v446
        %457 = vmatprep.subr.bf16.mxu0 0
        %458 = vmatpush1.bf16.msra.mxu0 %v445
        %459 = vmatprep.subr.bf16.mxu0 0
        %460 = vmatpush1.bf16.msra.mxu0 %v444
        %461 = vmatprep.subr.bf16.mxu0 0
        %462 = vmatpush1.bf16.msra.mxu0 %v443
        %463 = vmatprep.subr.bf16.mxu0 0
        %464 = vmatpush1.bf16.msra.mxu0 %v442
        %465 = vmatprep.subr.bf16.mxu0 0
        %466 = vmatpush1.bf16.msra.mxu0 %v441
        %467 = vmatprep.subr.bf16.mxu0 0
        %468 = vmatpush1.bf16.msra.mxu0 %v440
        %469 = vmatprep.subr.bf16.mxu0 0
        %470 = vmatpush1.bf16.msra.mxu0 %v439
        %471 = vmatprep.subr.bf16.mxu0 0
        %472 = vmatpush2.bf16.msra.mxu0 0
        %473 = vmatprep.subr.bf16.mxu0 0
        %474 = vmatpush2.bf16.msra.mxu0 0
        %475 = vmatprep.subr.bf16.mxu0 0
        %476 = vmatpush2.bf16.msra.mxu0 0
        %477 = vmatprep.subr.bf16.mxu0 0
        %478 = vmatpush2.bf16.msra.mxu0 0
        %479 = vmatprep.subr.bf16.mxu0 0
        %480 = vmatpush2.bf16.msra.mxu0 0
        %481 = vmatprep.subr.bf16.mxu0 0
        %482 = vmatpush2.bf16.msra.mxu0 0
        %483 = vmatprep.subr.bf16.mxu0 0
        %484 = vmatpush2.bf16.msra.mxu0 0
        %485 = vmatprep.subr.bf16.mxu0 0
        %486 = vmatpush2.bf16.msra.mxu0 0
        %487 = vmatprep.mubr.bf16.mxu0 0
        %488 = vmatmul.mubr.bf16.gmra.mxu0 %v383
        %v489 = vpop.f32.mrf.mxu0
        %v490 = vadd.f32 %v405, %v489
        %v491 = vpop.f32.mrf.mxu0
        %v492 = vpop.f32.mrf.mxu0
        %v493 = vadd.f32 %v405, %v492
        %v494 = vpop.f32.mrf.mxu0
        %495 = vdwg.mxu0
        %v496 = vpack.c.bf16 %v493, %v490
        %v498 = vunpack.c.l.b16 %v496
        %v499 = vunpack.c.h.b16 %v496
        %v500 = vpack.c.b16 %v498, %v498
        %v501 = vpack.c.b16 %v499, %v499
        %504 = vst [vmem:[%s303] sm:$0xf] %v500
        %505 = vst [vmem:[%s303 + $0x4] sm:$0xf] %v501
        %s506 = sand.u32 %s165, 1
        %s507 = scalar_lea.sflag [#allocation4], %s506
        %s508 = sand.u32 %s165, 1
        %s509 = smul.addr %s508, 8
        %s510 = scalar_lea.vmem [#allocation8], %s509
        // Predicated region
        $region53: #{tpu_custom_call.1} parent=39 // pred_check
          %p511 = pneg %p175
        $region54: #{tpu_custom_call.1} parent=39 // pred_check_branch
          %513 = sbr.rel (%p511) target = $region56
        $region55: #{tpu_custom_call.1} parent=39 // pred_region
          %s514 = smul.u32 2, %s27
          %s516 = ssub.s32 128, 128
          %517 = vsyncadd %s507, %s516
          %s518 = sadd.s32 %s28, %s514
          %s519 = smul.addr %s518, 64
          %s520 = scalar_lea.hbm %s5, %s519
          %s521 = sshll.u32 %s510, 4
          %s522 = int_to_ptr.vmem [resolvable:$true] %s521
          %527 = dma.vmem_to_hbm [thread:$0]  %s522, 128, %s520, %s507, 64, 64, 4
        $region56: #{tpu_custom_call.1} parent=39 // pred_fallthru
          _
      $region40: #{tpu_custom_call.1} parent=5 // pred_fallthru
        _
      %p528 = scmp.le.s32.totalorder 2, %s18
      // Predicated region
      $region57: #{tpu_custom_call.1} parent=5 // pred_check
        %p529 = pneg %p528
      $region58: #{tpu_custom_call.1} parent=5 // pred_check_branch
        %531 = sbr.rel (%p529) target = $region60
      $region59: #{tpu_custom_call.1} parent=5 // pred_region
        %s532 = ssub.s32 %s18, 2
        // Predicated region
        $region61: #{tpu_custom_call.1} parent=59 // pred_check
          %p533 = pneg %p181
        $region62: #{tpu_custom_call.1} parent=59 // pred_check_branch
          %535 = sbr.rel (%p533) target = $region64
        $region63: #{tpu_custom_call.1} parent=59 // pred_region
          %s536 = sand.u32 %s166, 1
          %s537 = scalar_lea.sflag [#allocation4], %s536
          %s538 = sand.u32 %s166, 1
          %s539 = smul.addr %s538, 8
          %s540 = scalar_lea.vmem [#allocation8], %s539
          %541 = dma.done %s537, 128
        $region64: #{tpu_custom_call.1} parent=59 // pred_fallthru
          _
      $region60: #{tpu_custom_call.1} parent=5 // pred_fallthru
        _
    $region6: #{tpu_custom_call.1} parent=1 // loop_footer
      %s22 = sadd.s32 1, %s18
    $region7: #{tpu_custom_call.1} parent=1 // loop_footer_branch
      %17 = sbr.rel target = $region3
    $region8: #{tpu_custom_call.1} parent=1 // loop_exit
      _
    %542 = vsyncpa [#allocation3], 1
    %s543 = scalar_lea.sflag [#allocation3], 1
    %544 = vsyncpa %s543, 1
    %545 = vsyncpa [#allocation6], 1
    %546 = vsyncpa [#allocation4], 1
    %s547 = scalar_lea.sflag [#allocation4], 1
    %548 = vsyncpa %s547, 1

</llo_original>
